<compile_context>
chip_gen: v6e
topology: v6e:2x2x1
jax: 0.10.0
libtpu: 0.0.40
codegen_flags: <defaults>
</compile_context>

<pallas_src>
import functools

import jax
import jax.numpy as jnp
from jax import lax
from jax.experimental import pallas as pl
from jax.experimental.pallas import tpu as pltpu


def _round_up(x, m):
    return (x + m - 1) // m * m


# ----------------------------------------------------------------------------
# Pallas kernel: fused 3x3 conv (single K=9*Cin MXU dot) + BN(eval) + ReLU
# ----------------------------------------------------------------------------

def _conv3x3_bn_relu_kernel(x_ref, w_ref, b_ref, o_ref, *, H, W, Cin):
    """One image x one Cout tile.

    x_ref: (1, Cin, (H+2)*(W+2)) f32  flattened zero-padded image (NCHW order)
    w_ref: (TCO, 9*Cin)          bf16 BN-scale-folded weights, taps-major cols
    b_ref: (TCO, 1)              f32  folded BN + conv bias
    o_ref: (1, TCO, H*W)         bf16 flat NCHW output block (lane-dense)
    """
    Wp = W + 2
    # Extended flat length: covers up to the last real pixel of the last row.
    L = H * Wp - 2

    # In-kernel im2col ("flat padded row" trick): tap (dy, dx) is the
    # contiguous lane-slice starting at dy*(W+2)+dx.  Rows are taps-major,
    # channels-minor, matching w_ref's column order.  No reshapes needed.
    taps = []
    for dy in range(3):
        for dx in range(3):
            s = dy * Wp + dx
            taps.append(x_ref[0, :, s:s + L])            # (Cin, L) f32
    patches = jnp.concatenate(taps, axis=0)              # (9*Cin, L)
    patches = patches.astype(jnp.bfloat16)

    # Single fused MXU dot, K = 9*Cin, f32 accumulation.
    y = jnp.dot(w_ref[...], patches,
                preferred_element_type=jnp.float32)      # (TCO, L) f32
    y = jnp.maximum(y + b_ref[...], 0.0)                 # bias + ReLU (f32)
    y = y.astype(o_ref.dtype)                            # bf16 once, in-reg

    # Drop the 2 junk columns at every padded-row boundary and store the
    # lane-dense flat NCHW output (output block's last dim is H*W).
    for h in range(H):
        o_ref[0, :, h * W:(h + 1) * W] = y[:, h * Wp:h * Wp + W]


# ----------------------------------------------------------------------------
# Wrapper
# ----------------------------------------------------------------------------

def conv3x3_block_x1_forward(params, x_nchw):
    """(conv3x3 pad=1 => BN(eval) => ReLU); NCHW in, NCHW (bf16) out."""
    w = params["w"]                      # (Cout, Cin, 3, 3) f32
    scale = params["scale"]              # (Cout,) f32  folded BN scale
    bias = params["bias"]                # (Cout,) f32  folded BN/conv bias
    Cout, Cin = int(w.shape[0]), int(w.shape[1])
    N, _, H, W = (int(d) for d in x_nchw.shape)
    Hp, Wp = H + 2, W + 2

    # Cout tiling: lanes are spatial, so only the 8-sublane granule matters.
    # If N == 1, split Cout in two so v7x's 2 TensorCores both get a step.
    if N == 1 and Cout >= 16:
        n_co = 2
    else:
        n_co = max(1, pl.cdiv(Cout, 256))        # cap the weight-tile height
    tco = _round_up(pl.cdiv(Cout, n_co), 8)
    cout_pad = n_co * tco

    # Fold BN scale into the weights in f32, then quantize to bf16.  Column
    # order is taps-major / channels-minor: col = (dy*3 + dx)*Cin + c.
    w_mat = jnp.transpose(w * scale[:, None, None, None], (0, 2, 3, 1))
    w_mat = w_mat.reshape(Cout, 9 * Cin)
    w_mat = jnp.pad(w_mat, ((0, cout_pad - Cout), (0, 0))).astype(jnp.bfloat16)
    b_col = jnp.pad(bias, (0, cout_pad - Cout)).reshape(cout_pad, 1)
    b_col = b_col.astype(jnp.float32)

    # Single tiny XLA pass: spatial zero padding (padding=1).  The flatten is
    # a row-major collapse (free bitcast).  No transposes, no casts, no slices.
    x_pad = jnp.pad(x_nchw, ((0, 0), (0, 0), (1, 1), (1, 1)))
    x_flat = x_pad.reshape(N, Cin, Hp * Wp)

    kernel = functools.partial(_conv3x3_bn_relu_kernel, H=H, W=W, Cin=Cin)
    y = pl.pallas_call(
        kernel,
        out_shape=jax.ShapeDtypeStruct((N, cout_pad, H * W), jnp.bfloat16),
        # Cout-tile outer, batch INNER: consecutive steps keep the same weight
        # block index, so the weight tile is not re-DMA'd per image.
        grid=(n_co, N),
        in_specs=[
            pl.BlockSpec((1, Cin, Hp * Wp), lambda j, n: (n, 0, 0)),
            pl.BlockSpec((tco, 9 * Cin), lambda j, n: (j, 0)),
            pl.BlockSpec((tco, 1), lambda j, n: (j, 0)),
        ],
        out_specs=pl.BlockSpec((1, tco, H * W), lambda j, n: (n, j, 0)),
        compiler_params=pltpu.CompilerParams(
            dimension_semantics=("parallel", "parallel")),
    )(x_flat, w_mat, b_col)

    y = y.reshape(N, cout_pad, H, W)       # free row-major un-flatten
    if cout_pad != Cout:
        y = y[:, :Cout]                    # only needed when Cout % 8 != 0
    return y                               # NCHW, bf16


# ----------------------------------------------------------------------------
# Parameters (mirrors nn.Conv2d(in,out,3,padding=1) + nn.BatchNorm2d(out) eval)
# ----------------------------------------------------------------------------

def init_params(key, in_ch, out_ch):
    kw, kb = jax.random.split(key)
    fan_in = in_ch * 9
    std = (2.0 / fan_in) ** 0.5
    w = jax.random.normal(kw, (out_ch, in_ch, 3, 3), jnp.float32) * std
    bound = 1.0 / (fan_in ** 0.5)
    b = jax.random.uniform(kb, (out_ch,), jnp.float32, -bound, bound)
    # BN eval: gamma=1, beta=0, running_mean=0, running_var=1, eps=1e-5,
    # folded with the conv bias into (scale, bias).
    eps = 1e-5
    gamma = jnp.ones((out_ch,), jnp.float32)
    beta = jnp.zeros((out_ch,), jnp.float32)
    mean = jnp.zeros((out_ch,), jnp.float32)
    var = jnp.ones((out_ch,), jnp.float32)
    scale = gamma / jnp.sqrt(var + eps)
    bias = beta + (b - mean) * scale
    return {"w": w, "scale": scale, "bias": bias}


# ----------------------------------------------------------------------------
# Pure-JAX reference (same folded-scale bf16 weights, bf16 inputs, f32 math)
# ----------------------------------------------------------------------------

def reference_forward(params, x_nchw):
    w = params["w"] * params["scale"][:, None, None, None]
    w = w.astype(jnp.bfloat16).astype(jnp.float32)
    x = x_nchw.astype(jnp.bfloat16).astype(jnp.float32)
    y = lax.conv_general_dilated(
        x, w, window_strides=(1, 1), padding=((1, 1), (1, 1)),
        dimension_numbers=("NCHW", "OIHW", "NCHW"))
    y = y + params["bias"][None, :, None, None]
    y = jnp.maximum(y, 0.0)
    return y.astype(jnp.bfloat16).astype(jnp.float32)


# ----------------------------------------------------------------------------
# Main
# ----------------------------------------------------------------------------

if __name__ == "__main__":
    key = jax.random.PRNGKey(0)
    pkey, xkey = jax.random.split(key)

    in_ch, out_ch = 4, 64
    N, H, W = 2, 16, 16

    params = init_params(pkey, in_ch, out_ch)
    x = jax.random.normal(xkey, (N, in_ch, H, W), jnp.float32)   # NCHW

    fwd = jax.jit(conv3x3_block_x1_forward)
    out = jax.block_until_ready(fwd(params, x))

    assert out.shape == (N, out_ch, H, W), out.shape
    assert bool(jnp.all(jnp.isfinite(out)))

    out_f32 = out.astype(jnp.float32)
    ref = reference_forward(params, x)
    err = float(jnp.max(jnp.abs(out_f32 - ref)))
    assert bool(jnp.allclose(out_f32, ref, atol=2e-2, rtol=2e-2)), err

    print("KERNEL_OK")
</pallas_src>

<mosaic_0001>
module attributes {stable_mosaic.version = 11 : i64} {
  func.func @_conv3x3_bn_relu_kernel(%arg0: i32, %arg1: i32, %arg2: memref<1x4x324xf32, #tpu.memory_space<vmem>>, %arg3: memref<64x36xbf16, #tpu.memory_space<vmem>>, %arg4: memref<64x1xf32, #tpu.memory_space<vmem>>, %arg5: memref<1x64x256xbf16, #tpu.memory_space<vmem>>) attributes {dimension_semantics = [#tpu.dimension_semantics<parallel>, #tpu.dimension_semantics<parallel>], iteration_bounds = array<i64: 1, 2>, scalar_prefetch = 0 : i64, scratch_operands = 0 : i64, tpu.core_type = #tpu.core_type<tc>, window_params = [{transform_indices = @transform_0, window_bounds = array<i64: 1, 4, 324>}, {transform_indices = @transform_1, window_bounds = array<i64: 64, 36>}, {transform_indices = @transform_2, window_bounds = array<i64: 64, 1>}, {transform_indices = @transform_3, window_bounds = array<i64: 1, 64, 256>}]} {
    %c0 = arith.constant 0 : index
    %c0_0 = arith.constant 0 : index
    %c0_1 = arith.constant 0 : index
    %0 = vector.load %arg2[%c0, %c0_0, %c0_1] : memref<1x4x324xf32, #tpu.memory_space<vmem>>, vector<1x4x286xf32>
    %1 = vector.shape_cast %0 : vector<1x4x286xf32> to vector<4x286xf32>
    %c0_2 = arith.constant 0 : index
    %c0_3 = arith.constant 0 : index
    %c1 = arith.constant 1 : index
    %2 = vector.load %arg2[%c0_2, %c0_3, %c1] : memref<1x4x324xf32, #tpu.memory_space<vmem>>, vector<1x4x286xf32>
    %3 = vector.shape_cast %2 : vector<1x4x286xf32> to vector<4x286xf32>
    %c0_4 = arith.constant 0 : index
    %c0_5 = arith.constant 0 : index
    %c2 = arith.constant 2 : index
    %4 = vector.load %arg2[%c0_4, %c0_5, %c2] : memref<1x4x324xf32, #tpu.memory_space<vmem>>, vector<1x4x286xf32>
    %5 = vector.shape_cast %4 : vector<1x4x286xf32> to vector<4x286xf32>
    %c0_6 = arith.constant 0 : index
    %c0_7 = arith.constant 0 : index
    %c18 = arith.constant 18 : index
    %6 = vector.load %arg2[%c0_6, %c0_7, %c18] : memref<1x4x324xf32, #tpu.memory_space<vmem>>, vector<1x4x286xf32>
    %7 = vector.shape_cast %6 : vector<1x4x286xf32> to vector<4x286xf32>
    %c0_8 = arith.constant 0 : index
    %c0_9 = arith.constant 0 : index
    %c19 = arith.constant 19 : index
    %8 = vector.load %arg2[%c0_8, %c0_9, %c19] : memref<1x4x324xf32, #tpu.memory_space<vmem>>, vector<1x4x286xf32>
    %9 = vector.shape_cast %8 : vector<1x4x286xf32> to vector<4x286xf32>
    %c0_10 = arith.constant 0 : index
    %c0_11 = arith.constant 0 : index
    %c20 = arith.constant 20 : index
    %10 = vector.load %arg2[%c0_10, %c0_11, %c20] : memref<1x4x324xf32, #tpu.memory_space<vmem>>, vector<1x4x286xf32>
    %11 = vector.shape_cast %10 : vector<1x4x286xf32> to vector<4x286xf32>
    %c0_12 = arith.constant 0 : index
    %c0_13 = arith.constant 0 : index
    %c36 = arith.constant 36 : index
    %12 = vector.load %arg2[%c0_12, %c0_13, %c36] : memref<1x4x324xf32, #tpu.memory_space<vmem>>, vector<1x4x286xf32>
    %13 = vector.shape_cast %12 : vector<1x4x286xf32> to vector<4x286xf32>
    %c0_14 = arith.constant 0 : index
    %c0_15 = arith.constant 0 : index
    %c37 = arith.constant 37 : index
    %14 = vector.load %arg2[%c0_14, %c0_15, %c37] : memref<1x4x324xf32, #tpu.memory_space<vmem>>, vector<1x4x286xf32>
    %15 = vector.shape_cast %14 : vector<1x4x286xf32> to vector<4x286xf32>
    %c0_16 = arith.constant 0 : index
    %c0_17 = arith.constant 0 : index
    %c38 = arith.constant 38 : index
    %16 = vector.load %arg2[%c0_16, %c0_17, %c38] : memref<1x4x324xf32, #tpu.memory_space<vmem>>, vector<1x4x286xf32>
    %17 = vector.shape_cast %16 : vector<1x4x286xf32> to vector<4x286xf32>
    %18 = tpu.concatenate %1, %3, %5, %7, %9, %11, %13, %15, %17 in 0 : vector<4x286xf32>, vector<4x286xf32>, vector<4x286xf32>, vector<4x286xf32>, vector<4x286xf32>, vector<4x286xf32>, vector<4x286xf32>, vector<4x286xf32>, vector<4x286xf32> -> vector<36x286xf32>
    %19 = arith.truncf %18 : vector<36x286xf32> to vector<36x286xbf16>
    %c0_18 = arith.constant 0 : index
    %c0_19 = arith.constant 0 : index
    %20 = vector.load %arg3[%c0_18, %c0_19] : memref<64x36xbf16, #tpu.memory_space<vmem>>, vector<64x36xbf16>
    %cst = arith.constant dense<0.000000e+00> : vector<64x286xf32>
    %21 = tpu.matmul %20, %19, %cst {dimension_numbers = #tpu.dot_dimension_numbers<[1], [0], [0], [1], [0, 0, 1, 1], [], []>} : vector<64x36xbf16>, vector<36x286xbf16>, vector<64x286xf32> -> vector<64x286xf32>
    %c0_20 = arith.constant 0 : index
    %c0_21 = arith.constant 0 : index
    %22 = vector.load %arg4[%c0_20, %c0_21] : memref<64x1xf32, #tpu.memory_space<vmem>>, vector<64x1xf32>
    %23 = vector.broadcast %22 : vector<64x1xf32> to vector<64x286xf32>
    %24 = arith.addf %21, %23 : vector<64x286xf32>
    %cst_22 = arith.constant 0.000000e+00 : f32
    %25 = vector.broadcast %cst_22 : f32 to vector<64x286xf32>
    %26 = arith.maximumf %24, %25 : vector<64x286xf32>
    %27 = arith.truncf %26 : vector<64x286xf32> to vector<64x286xbf16>
    %28 = vector.extract_strided_slice %27 {offsets = [0, 0], sizes = [64, 16], strides = [1, 1]} : vector<64x286xbf16> to vector<64x16xbf16>
    %c0_23 = arith.constant 0 : index
    %c0_24 = arith.constant 0 : index
    %c0_25 = arith.constant 0 : index
    %29 = vector.load %arg5[%c0_23, %c0_24, %c0_25] : memref<1x64x256xbf16, #tpu.memory_space<vmem>>, vector<1x64x16xbf16>
    %30 = vector.shape_cast %29 : vector<1x64x16xbf16> to vector<64x16xbf16>
    %31 = vector.shape_cast %28 : vector<64x16xbf16> to vector<1x64x16xbf16>
    tpu.vector_store %arg5[%c0_23, %c0_24, %c0_25], %31 {strides = array<i32>} : memref<1x64x256xbf16, #tpu.memory_space<vmem>>, vector<1x64x16xbf16>,
    %32 = vector.extract_strided_slice %27 {offsets = [0, 18], sizes = [64, 16], strides = [1, 1]} : vector<64x286xbf16> to vector<64x16xbf16>
    %c0_26 = arith.constant 0 : index
    %c0_27 = arith.constant 0 : index
    %c16 = arith.constant 16 : index
    %33 = vector.load %arg5[%c0_26, %c0_27, %c16] : memref<1x64x256xbf16, #tpu.memory_space<vmem>>, vector<1x64x16xbf16>
    %34 = vector.shape_cast %33 : vector<1x64x16xbf16> to vector<64x16xbf16>
    %35 = vector.shape_cast %32 : vector<64x16xbf16> to vector<1x64x16xbf16>
    tpu.vector_store %arg5[%c0_26, %c0_27, %c16], %35 {strides = array<i32>} : memref<1x64x256xbf16, #tpu.memory_space<vmem>>, vector<1x64x16xbf16>,
    %36 = vector.extract_strided_slice %27 {offsets = [0, 36], sizes = [64, 16], strides = [1, 1]} : vector<64x286xbf16> to vector<64x16xbf16>
    %c0_28 = arith.constant 0 : index
    %c0_29 = arith.constant 0 : index
    %c32 = arith.constant 32 : index
    %37 = vector.load %arg5[%c0_28, %c0_29, %c32] : memref<1x64x256xbf16, #tpu.memory_space<vmem>>, vector<1x64x16xbf16>
    %38 = vector.shape_cast %37 : vector<1x64x16xbf16> to vector<64x16xbf16>
    %39 = vector.shape_cast %36 : vector<64x16xbf16> to vector<1x64x16xbf16>
    tpu.vector_store %arg5[%c0_28, %c0_29, %c32], %39 {strides = array<i32>} : memref<1x64x256xbf16, #tpu.memory_space<vmem>>, vector<1x64x16xbf16>,
    %40 = vector.extract_strided_slice %27 {offsets = [0, 54], sizes = [64, 16], strides = [1, 1]} : vector<64x286xbf16> to vector<64x16xbf16>
    %c0_30 = arith.constant 0 : index
    %c0_31 = arith.constant 0 : index
    %c48 = arith.constant 48 : index
    %41 = vector.load %arg5[%c0_30, %c0_31, %c48] : memref<1x64x256xbf16, #tpu.memory_space<vmem>>, vector<1x64x16xbf16>
    %42 = vector.shape_cast %41 : vector<1x64x16xbf16> to vector<64x16xbf16>
    %43 = vector.shape_cast %40 : vector<64x16xbf16> to vector<1x64x16xbf16>
    tpu.vector_store %arg5[%c0_30, %c0_31, %c48], %43 {strides = array<i32>} : memref<1x64x256xbf16, #tpu.memory_space<vmem>>, vector<1x64x16xbf16>,
    %44 = vector.extract_strided_slice %27 {offsets = [0, 72], sizes = [64, 16], strides = [1, 1]} : vector<64x286xbf16> to vector<64x16xbf16>
    %c0_32 = arith.constant 0 : index
    %c0_33 = arith.constant 0 : index
    %c64 = arith.constant 64 : index
    %45 = vector.load %arg5[%c0_32, %c0_33, %c64] : memref<1x64x256xbf16, #tpu.memory_space<vmem>>, vector<1x64x16xbf16>
    %46 = vector.shape_cast %45 : vector<1x64x16xbf16> to vector<64x16xbf16>
    %47 = vector.shape_cast %44 : vector<64x16xbf16> to vector<1x64x16xbf16>
    tpu.vector_store %arg5[%c0_32, %c0_33, %c64], %47 {strides = array<i32>} : memref<1x64x256xbf16, #tpu.memory_space<vmem>>, vector<1x64x16xbf16>,
    %48 = vector.extract_strided_slice %27 {offsets = [0, 90], sizes = [64, 16], strides = [1, 1]} : vector<64x286xbf16> to vector<64x16xbf16>
    %c0_34 = arith.constant 0 : index
    %c0_35 = arith.constant 0 : index
    %c80 = arith.constant 80 : index
    %49 = vector.load %arg5[%c0_34, %c0_35, %c80] : memref<1x64x256xbf16, #tpu.memory_space<vmem>>, vector<1x64x16xbf16>
    %50 = vector.shape_cast %49 : vector<1x64x16xbf16> to vector<64x16xbf16>
    %51 = vector.shape_cast %48 : vector<64x16xbf16> to vector<1x64x16xbf16>
    tpu.vector_store %arg5[%c0_34, %c0_35, %c80], %51 {strides = array<i32>} : memref<1x64x256xbf16, #tpu.memory_space<vmem>>, vector<1x64x16xbf16>,
    %52 = vector.extract_strided_slice %27 {offsets = [0, 108], sizes = [64, 16], strides = [1, 1]} : vector<64x286xbf16> to vector<64x16xbf16>
    %c0_36 = arith.constant 0 : index
    %c0_37 = arith.constant 0 : index
    %c96 = arith.constant 96 : index
    %53 = vector.load %arg5[%c0_36, %c0_37, %c96] : memref<1x64x256xbf16, #tpu.memory_space<vmem>>, vector<1x64x16xbf16>
    %54 = vector.shape_cast %53 : vector<1x64x16xbf16> to vector<64x16xbf16>
    %55 = vector.shape_cast %52 : vector<64x16xbf16> to vector<1x64x16xbf16>
    tpu.vector_store %arg5[%c0_36, %c0_37, %c96], %55 {strides = array<i32>} : memref<1x64x256xbf16, #tpu.memory_space<vmem>>, vector<1x64x16xbf16>,
    %56 = vector.extract_strided_slice %27 {offsets = [0, 126], sizes = [64, 16], strides = [1, 1]} : vector<64x286xbf16> to vector<64x16xbf16>
    %c0_38 = arith.constant 0 : index
    %c0_39 = arith.constant 0 : index
    %c112 = arith.constant 112 : index
    %57 = vector.load %arg5[%c0_38, %c0_39, %c112] : memref<1x64x256xbf16, #tpu.memory_space<vmem>>, vector<1x64x16xbf16>
    %58 = vector.shape_cast %57 : vector<1x64x16xbf16> to vector<64x16xbf16>
    %59 = vector.shape_cast %56 : vector<64x16xbf16> to vector<1x64x16xbf16>
    tpu.vector_store %arg5[%c0_38, %c0_39, %c112], %59 {strides = array<i32>} : memref<1x64x256xbf16, #tpu.memory_space<vmem>>, vector<1x64x16xbf16>,
    %60 = vector.extract_strided_slice %27 {offsets = [0, 144], sizes = [64, 16], strides = [1, 1]} : vector<64x286xbf16> to vector<64x16xbf16>
    %c0_40 = arith.constant 0 : index
    %c0_41 = arith.constant 0 : index
    %c128 = arith.constant 128 : index
    %61 = vector.load %arg5[%c0_40, %c0_41, %c128] : memref<1x64x256xbf16, #tpu.memory_space<vmem>>, vector<1x64x16xbf16>
    %62 = vector.shape_cast %61 : vector<1x64x16xbf16> to vector<64x16xbf16>
    %63 = vector.shape_cast %60 : vector<64x16xbf16> to vector<1x64x16xbf16>
    tpu.vector_store %arg5[%c0_40, %c0_41, %c128], %63 {strides = array<i32>} : memref<1x64x256xbf16, #tpu.memory_space<vmem>>, vector<1x64x16xbf16>,
    %64 = vector.extract_strided_slice %27 {offsets = [0, 162], sizes = [64, 16], strides = [1, 1]} : vector<64x286xbf16> to vector<64x16xbf16>
    %c0_42 = arith.constant 0 : index
    %c0_43 = arith.constant 0 : index
    %c144 = arith.constant 144 : index
    %65 = vector.load %arg5[%c0_42, %c0_43, %c144] : memref<1x64x256xbf16, #tpu.memory_space<vmem>>, vector<1x64x16xbf16>
    %66 = vector.shape_cast %65 : vector<1x64x16xbf16> to vector<64x16xbf16>
    %67 = vector.shape_cast %64 : vector<64x16xbf16> to vector<1x64x16xbf16>
    tpu.vector_store %arg5[%c0_42, %c0_43, %c144], %67 {strides = array<i32>} : memref<1x64x256xbf16, #tpu.memory_space<vmem>>, vector<1x64x16xbf16>,
    %68 = vector.extract_strided_slice %27 {offsets = [0, 180], sizes = [64, 16], strides = [1, 1]} : vector<64x286xbf16> to vector<64x16xbf16>
    %c0_44 = arith.constant 0 : index
    %c0_45 = arith.constant 0 : index
    %c160 = arith.constant 160 : index
    %69 = vector.load %arg5[%c0_44, %c0_45, %c160] : memref<1x64x256xbf16, #tpu.memory_space<vmem>>, vector<1x64x16xbf16>
    %70 = vector.shape_cast %69 : vector<1x64x16xbf16> to vector<64x16xbf16>
    %71 = vector.shape_cast %68 : vector<64x16xbf16> to vector<1x64x16xbf16>
    tpu.vector_store %arg5[%c0_44, %c0_45, %c160], %71 {strides = array<i32>} : memref<1x64x256xbf16, #tpu.memory_space<vmem>>, vector<1x64x16xbf16>,
    %72 = vector.extract_strided_slice %27 {offsets = [0, 198], sizes = [64, 16], strides = [1, 1]} : vector<64x286xbf16> to vector<64x16xbf16>
    %c0_46 = arith.constant 0 : index
    %c0_47 = arith.constant 0 : index
    %c176 = arith.constant 176 : index
    %73 = vector.load %arg5[%c0_46, %c0_47, %c176] : memref<1x64x256xbf16, #tpu.memory_space<vmem>>, vector<1x64x16xbf16>
    %74 = vector.shape_cast %73 : vector<1x64x16xbf16> to vector<64x16xbf16>
    %75 = vector.shape_cast %72 : vector<64x16xbf16> to vector<1x64x16xbf16>
    tpu.vector_store %arg5[%c0_46, %c0_47, %c176], %75 {strides = array<i32>} : memref<1x64x256xbf16, #tpu.memory_space<vmem>>, vector<1x64x16xbf16>,
    %76 = vector.extract_strided_slice %27 {offsets = [0, 216], sizes = [64, 16], strides = [1, 1]} : vector<64x286xbf16> to vector<64x16xbf16>
    %c0_48 = arith.constant 0 : index
    %c0_49 = arith.constant 0 : index
    %c192 = arith.constant 192 : index
    %77 = vector.load %arg5[%c0_48, %c0_49, %c192] : memref<1x64x256xbf16, #tpu.memory_space<vmem>>, vector<1x64x16xbf16>
    %78 = vector.shape_cast %77 : vector<1x64x16xbf16> to vector<64x16xbf16>
    %79 = vector.shape_cast %76 : vector<64x16xbf16> to vector<1x64x16xbf16>
    tpu.vector_store %arg5[%c0_48, %c0_49, %c192], %79 {strides = array<i32>} : memref<1x64x256xbf16, #tpu.memory_space<vmem>>, vector<1x64x16xbf16>,
    %80 = vector.extract_strided_slice %27 {offsets = [0, 234], sizes = [64, 16], strides = [1, 1]} : vector<64x286xbf16> to vector<64x16xbf16>
    %c0_50 = arith.constant 0 : index
    %c0_51 = arith.constant 0 : index
    %c208 = arith.constant 208 : index
    %81 = vector.load %arg5[%c0_50, %c0_51, %c208] : memref<1x64x256xbf16, #tpu.memory_space<vmem>>, vector<1x64x16xbf16>
    %82 = vector.shape_cast %81 : vector<1x64x16xbf16> to vector<64x16xbf16>
    %83 = vector.shape_cast %80 : vector<64x16xbf16> to vector<1x64x16xbf16>
    tpu.vector_store %arg5[%c0_50, %c0_51, %c208], %83 {strides = array<i32>} : memref<1x64x256xbf16, #tpu.memory_space<vmem>>, vector<1x64x16xbf16>,
    %84 = vector.extract_strided_slice %27 {offsets = [0, 252], sizes = [64, 16], strides = [1, 1]} : vector<64x286xbf16> to vector<64x16xbf16>
    %c0_52 = arith.constant 0 : index
    %c0_53 = arith.constant 0 : index
    %c224 = arith.constant 224 : index
    %85 = vector.load %arg5[%c0_52, %c0_53, %c224] : memref<1x64x256xbf16, #tpu.memory_space<vmem>>, vector<1x64x16xbf16>
    %86 = vector.shape_cast %85 : vector<1x64x16xbf16> to vector<64x16xbf16>
    %87 = vector.shape_cast %84 : vector<64x16xbf16> to vector<1x64x16xbf16>
    tpu.vector_store %arg5[%c0_52, %c0_53, %c224], %87 {strides = array<i32>} : memref<1x64x256xbf16, #tpu.memory_space<vmem>>, vector<1x64x16xbf16>,
    %88 = vector.extract_strided_slice %27 {offsets = [0, 270], sizes = [64, 16], strides = [1, 1]} : vector<64x286xbf16> to vector<64x16xbf16>
    %c0_54 = arith.constant 0 : index
    %c0_55 = arith.constant 0 : index
    %c240 = arith.constant 240 : index
    %89 = vector.load %arg5[%c0_54, %c0_55, %c240] : memref<1x64x256xbf16, #tpu.memory_space<vmem>>, vector<1x64x16xbf16>
    %90 = vector.shape_cast %89 : vector<1x64x16xbf16> to vector<64x16xbf16>
    %91 = vector.shape_cast %88 : vector<64x16xbf16> to vector<1x64x16xbf16>
    tpu.vector_store %arg5[%c0_54, %c0_55, %c240], %91 {strides = array<i32>} : memref<1x64x256xbf16, #tpu.memory_space<vmem>>, vector<1x64x16xbf16>,
    return
  }
  func.func @transform_0(%arg0: i32, %arg1: i32) -> (i32, i32, i32) {
    %c0_i32 = arith.constant 0 : i32
    %c0_i32_0 = arith.constant 0 : i32
    %c0_i32_1 = arith.constant 0 : i32
    return %arg1, %c0_i32, %c0_i32_0 : i32, i32, i32
  }
  func.func @transform_1(%arg0: i32, %arg1: i32) -> (i32, i32) {
    %c0_i32 = arith.constant 0 : i32
    %c0_i32_0 = arith.constant 0 : i32
    return %arg0, %c0_i32 : i32, i32
  }
  func.func @transform_2(%arg0: i32, %arg1: i32) -> (i32, i32) {
    %c0_i32 = arith.constant 0 : i32
    %c0_i32_0 = arith.constant 0 : i32
    return %arg0, %c0_i32 : i32, i32
  }
  func.func @transform_3(%arg0: i32, %arg1: i32) -> (i32, i32, i32) {
    %c0_i32 = arith.constant 0 : i32
    %c0_i32_0 = arith.constant 0 : i32
    return %arg1, %arg0, %c0_i32 : i32, i32, i32
  }
}

</mosaic_0001>

<llo_original>
// kernel: conv3x3_block_x1_forward.1
$region0: #{conv3x3_block_x1_forward.1}
  #allocation0 [shape = 'u32[]', space=smem, size = 0x4, offset = 0x4, fixed_abs, tag = 'smem constant byte address 0x4 - core index']
  #allocation1 [shape = 'u32[144,128]{1,0:T(1,128)}', space=vmem, size = 0x12000, scoped, tag = 'internal scratch']
  %s0 = inlined_call_operand.vmem [shape: f32[2,4,324], index: 0, kind: input, shape index: {}]
  %s1 = inlined_call_operand.vmem [shape: bf16[64,36], index: 1, kind: input, shape index: {}]
  %s2 = inlined_call_operand.vmem [shape: f32[64,1], index: 2, kind: input, shape index: {}]
  %s3 = inlined_call_operand.vmem [shape: bf16[2,64,256], index: 3, kind: output, shape index: {}]
  %s4 = sld [smem:[#allocation0]]
  $region45: #{conv3x3_block_x1_forward.1} parent=0
    _
  %s6 = ssub.s32 1, %s4
  %s7 = scalar_select 0, %s6, %s4
  loop: start=0, step=1, limit=4
  $region2: #{conv3x3_block_x1_forward.1} parent=0 // loop_pre_header
    _
  $region3: #{conv3x3_block_x1_forward.1} parent=0 // loop_header
    %s9 = sphi 0, %s13
    %p10 = scmp.ge.s32.totalorder %s9, 4
    %s16 = sphi 0, %s28
    %s17 = sphi 0, %s24
    %s18 = sphi 0, %s16
    %s19 = sphi 0, %s17
    %s20 = sphi 0, %s18
    %s21 = sphi 0, %s19
    %s31 = sphi 0, %s33
    %s34 = sphi 0, %s31
    %s35 = sphi 0, %s34
    %s51 = sphi 0, %s35
    %s57 = sphi 0, %s59
    %s60 = sphi 0, %s57
    %s61 = sphi 0, %s60
    %s77 = sphi 0, %s61
    %s83 = sphi 0, %s85
    %s86 = sphi 0, %s83
    %s87 = sphi 0, %s86
    %s103 = sphi 0, %s87
    %s111 = sphi 0, %s113
    %s114 = sphi 0, %s111
    %s115 = sphi 0, %s114
    %s131 = sphi 0, %s115
  $region4: #{conv3x3_block_x1_forward.1} parent=0 // loop_header_branch
    %12 = sbr.rel (%p10) target = $region8
  $region5: #{conv3x3_block_x1_forward.1} parent=0 // loop_body
    %s14 = ssub.s32 %s9, 1
    %s15 = ssub.s32 %s9, 2
    %s22 = sadd.s32 1, %s17
    %p23 = scmp.ge.s32.totalorder %s22, 2
    %s24 = scalar_select %p23, 0, %s22
    %s25 = sadd.s32 1, %s16
    %s26 = scalar_select %p23, %s25, %s16
    %p27 = scmp.ge.s32.totalorder %s26, 1
    %s28 = scalar_select %p27, 0, %s26
    %s29 = ssub.s32 %s17, %s24
    %p30 = scmp.eq.s32.totalorder %s29, 0
    %s32 = sadd.s32 %s31, 1
    %s33 = scalar_select %p30, %s31, %s32
    %p36 = pneg %p30
    %p37 = scmp.eq.s32.totalorder %s9, 1
    %p38 = por %p36, %p37
    %p39 = scmp.ne.s32.totalorder %s31, %s34
    %p40 = scmp.eq.s32.totalorder %s9, 0
    %p41 = por %p39, %p40
    %p42 = scmp.ne.s32.totalorder %s31, %s34
    %p43 = scmp.eq.s32.totalorder %s14, 1
    %p44 = por %p42, %p43
    %p45 = scmp.ne.s32.totalorder %s34, %s35
    %p46 = scmp.eq.s32.totalorder %s14, 0
    %p47 = por %p45, %p46
    %p48 = scmp.ne.s32.totalorder %s34, %s35
    %p49 = scmp.eq.s32.totalorder %s15, 1
    %p50 = por %p48, %p49
    %p52 = scmp.ne.s32.totalorder %s35, %s51
    %p53 = scmp.eq.s32.totalorder %s15, 0
    %p54 = por %p52, %p53
    %s55 = ssub.s32 %s16, %s28
    %p56 = scmp.eq.s32.totalorder %s55, 0
    %s58 = sadd.s32 %s57, 1
    %s59 = scalar_select %p56, %s57, %s58
    %p62 = pneg %p56
    %p63 = scmp.eq.s32.totalorder %s9, 1
    %p64 = por %p62, %p63
    %p65 = scmp.ne.s32.totalorder %s57, %s60
    %p66 = scmp.eq.s32.totalorder %s9, 0
    %p67 = por %p65, %p66
    %p68 = scmp.ne.s32.totalorder %s57, %s60
    %p69 = scmp.eq.s32.totalorder %s14, 1
    %p70 = por %p68, %p69
    %p71 = scmp.ne.s32.totalorder %s60, %s61
    %p72 = scmp.eq.s32.totalorder %s14, 0
    %p73 = por %p71, %p72
    %p74 = scmp.ne.s32.totalorder %s60, %s61
    %p75 = scmp.eq.s32.totalorder %s15, 1
    %p76 = por %p74, %p75
    %p78 = scmp.ne.s32.totalorder %s61, %s77
    %p79 = scmp.eq.s32.totalorder %s15, 0
    %p80 = por %p78, %p79
    %s81 = ssub.s32 %s16, %s28
    %p82 = scmp.eq.s32.totalorder %s81, 0
    %s84 = sadd.s32 %s83, 1
    %s85 = scalar_select %p82, %s83, %s84
    %p88 = pneg %p82
    %p89 = scmp.eq.s32.totalorder %s9, 1
    %p90 = por %p88, %p89
    %p91 = scmp.ne.s32.totalorder %s83, %s86
    %p92 = scmp.eq.s32.totalorder %s9, 0
    %p93 = por %p91, %p92
    %p94 = scmp.ne.s32.totalorder %s83, %s86
    %p95 = scmp.eq.s32.totalorder %s14, 1
    %p96 = por %p94, %p95
    %p97 = scmp.ne.s32.totalorder %s86, %s87
    %p98 = scmp.eq.s32.totalorder %s14, 0
    %p99 = por %p97, %p98
    %p100 = scmp.ne.s32.totalorder %s86, %s87
    %p101 = scmp.eq.s32.totalorder %s15, 1
    %p102 = por %p100, %p101
    %p104 = scmp.ne.s32.totalorder %s87, %s103
    %p105 = scmp.eq.s32.totalorder %s15, 0
    %p106 = por %p104, %p105
    %s107 = ssub.s32 %s17, %s24
    %s108 = ssub.s32 %s16, %s28
    %s109 = sor.u32 %s107, %s108
    %p110 = scmp.eq.s32.totalorder %s109, 0
    %s112 = sadd.s32 %s111, 1
    %s113 = scalar_select %p110, %s111, %s112
    %p116 = pneg %p110
    %p117 = scmp.eq.s32.totalorder %s9, 1
    %p118 = por %p116, %p117
    %p119 = scmp.ne.s32.totalorder %s111, %s114
    %p120 = scmp.eq.s32.totalorder %s9, 0
    %p121 = por %p119, %p120
    %p122 = scmp.ne.s32.totalorder %s111, %s114
    %p123 = scmp.eq.s32.totalorder %s14, 1
    %p124 = por %p122, %p123
    %p125 = scmp.ne.s32.totalorder %s114, %s115
    %p126 = scmp.eq.s32.totalorder %s14, 0
    %p127 = por %p125, %p126
    %p128 = scmp.ne.s32.totalorder %s114, %s115
    %p129 = scmp.eq.s32.totalorder %s15, 1
    %p130 = por %p128, %p129
    %p132 = scmp.ne.s32.totalorder %s115, %s131
    %p133 = scmp.eq.s32.totalorder %s15, 0
    %p134 = por %p132, %p133
    %p135 = scmp.le.s32.totalorder 1, %s9
    %p136 = scmp.lt.s32.totalorder %s9, 3
    %p137 = pnand %p135, %p136
    %p138 = pneg %p137
    // Predicated region
    $region9: #{conv3x3_block_x1_forward.1} parent=5 // pred_check
      _
    $region10: #{conv3x3_block_x1_forward.1} parent=5 // pred_check_branch
      %140 = sbr.rel (%p137) target = $region12
    $region11: #{conv3x3_block_x1_forward.1} parent=5 // pred_region
      %s141 = ssub.s32 %s9, 1
      // Predicated region
      $region13: #{conv3x3_block_x1_forward.1} parent=11 // pred_check
        %p142 = pneg %p73
      $region14: #{conv3x3_block_x1_forward.1} parent=11 // pred_check_branch
        %144 = sbr.rel (%p142) target = $region16
      $region15: #{conv3x3_block_x1_forward.1} parent=11 // pred_region
        %s145 = smul.u32 8, %s18
        %p146 = scmp.lt.s32.totalorder %s145, 7
        %s147 = scalar_select %p146, %s145, 7
        %s148 = smul.addr %s147, 4
        %s149 = scalar_lea.vmem %s1, %s148
        %s150 = smul.u32 8, %s18
      $region16: #{conv3x3_block_x1_forward.1} parent=11 // pred_fallthru
        _
      // Predicated region
      $region17: #{conv3x3_block_x1_forward.1} parent=11 // pred_check
        %p151 = pneg %p99
      $region18: #{conv3x3_block_x1_forward.1} parent=11 // pred_check_branch
        %153 = sbr.rel (%p151) target = $region20
      $region19: #{conv3x3_block_x1_forward.1} parent=11 // pred_region
        %s154 = smul.u32 8, %s18
        %p155 = scmp.lt.s32.totalorder %s154, 7
        %s156 = scalar_select %p155, %s154, 7
        %s157 = smul.addr %s156, 8
        %s158 = scalar_lea.vmem %s2, %s157
        %s159 = smul.u32 8, %s18
      $region20: #{conv3x3_block_x1_forward.1} parent=11 // pred_fallthru
        _
    $region12: #{conv3x3_block_x1_forward.1} parent=5 // pred_fallthru
      _
    %p160 = scmp.lt.s32.totalorder %s9, 2
    // Predicated region
    $region21: #{conv3x3_block_x1_forward.1} parent=5 // pred_check
      %p161 = pneg %p160
    $region22: #{conv3x3_block_x1_forward.1} parent=5 // pred_check_branch
      %163 = sbr.rel (%p161) target = $region24
    $region23: #{conv3x3_block_x1_forward.1} parent=5 // pred_region
      // Predicated region
      $region25: #{conv3x3_block_x1_forward.1} parent=23 // pred_check
        %p164 = pneg %p41
      $region26: #{conv3x3_block_x1_forward.1} parent=23 // pred_check_branch
        %166 = sbr.rel (%p164) target = $region28
      $region27: #{conv3x3_block_x1_forward.1} parent=23 // pred_region
        %p167 = scmp.lt.s32.totalorder %s17, 1
        %s168 = scalar_select %p167, %s17, 1
        %s169 = smul.addr %s168, 3
        %s170 = smul.addr %s169, 4
        %s171 = scalar_lea.vmem %s0, %s170
      $region28: #{conv3x3_block_x1_forward.1} parent=23 // pred_fallthru
        _
    $region24: #{conv3x3_block_x1_forward.1} parent=5 // pred_fallthru
      _
    %p172 = scmp.le.s32.totalorder 1, %s9
    %p173 = scmp.lt.s32.totalorder %s9, 3
    %p174 = pnand %p172, %p173
    %p175 = pneg %p174
    // Predicated region
    $region29: #{conv3x3_block_x1_forward.1} parent=5 // pred_check
      _
    $region30: #{conv3x3_block_x1_forward.1} parent=5 // pred_check_branch
      %177 = sbr.rel (%p174) target = $region32
    $region31: #{conv3x3_block_x1_forward.1} parent=5 // pred_region
      %s178 = ssub.s32 %s9, 1
      %p179 = scmp.lt.s32.totalorder %s19, 1
      %s180 = scalar_select %p179, %s19, 1
      %s181 = smul.addr %s180, 3
      %s182 = smul.addr %s181, 4
      %s183 = scalar_lea.vmem %s0, %s182
      %p184 = pneg %p47
      %p185 = pneg %p44
      %s186 = smul.u32 8, %s18
      %p187 = scmp.lt.s32.totalorder %s186, 7
      %s188 = scalar_select %p187, %s186, 7
      %s189 = smul.addr %s188, 4
      %s190 = scalar_lea.vmem %s1, %s189
      %p191 = pneg %p73
      %p192 = pneg %p70
      %s193 = smul.u32 8, %s18
      %p194 = scmp.lt.s32.totalorder %s193, 7
      %s195 = scalar_select %p194, %s193, 7
      %s196 = smul.addr %s195, 8
      %s197 = scalar_lea.vmem %s2, %s196
      %p198 = pneg %p99
      %p199 = pneg %p96
      %p200 = pneg %p127
      %p201 = pneg %p124
      %s202 = smul.u32 8, %s18
      %p203 = scmp.lt.s32.totalorder %s19, 1
      %s204 = scalar_select %p203, %s19, 1
      %p205 = scmp.lt.s32.totalorder %s202, 7
      %s206 = scalar_select %p205, %s202, 7
      %s207 = smul.addr %s206, 2
      %s208 = smul.addr %s204, 16
      %s209 = sadd.s32 %s207, %s208
      %s210 = smul.addr %s209, 4
      %s211 = scalar_lea.vmem %s3, %s210
      %p212 = scmp.lt.s32.totalorder %s19, 1
      %s213 = scalar_select %p212, %s19, 1
      %s214 = smul.addr %s213, 3
      %s215 = smul.addr %s214, 4
      %s216 = scalar_lea.vmem %s0, %s215
      %s217 = smul.u32 8, %s18
      %p218 = scmp.lt.s32.totalorder %s217, 7
      %s219 = scalar_select %p218, %s217, 7
      %s220 = smul.addr %s219, 4
      %s221 = scalar_lea.vmem %s1, %s220
      %s222 = smul.u32 8, %s18
      %s223 = smul.u32 8, %s18
      %p224 = scmp.lt.s32.totalorder %s223, 7
      %s225 = scalar_select %p224, %s223, 7
      %s226 = smul.addr %s225, 8
      %s227 = scalar_lea.vmem %s2, %s226
      %s228 = smul.u32 8, %s18
      %s229 = smul.u32 8, %s18
      %p230 = scmp.lt.s32.totalorder %s19, 1
      %s231 = scalar_select %p230, %s19, 1
      %p232 = scmp.lt.s32.totalorder %s229, 7
      %s233 = scalar_select %p232, %s229, 7
      %s234 = smul.addr %s233, 2
      %s235 = smul.addr %s231, 16
      %s236 = sadd.s32 %s234, %s235
      %s237 = smul.addr %s236, 4
      %s238 = scalar_lea.vmem %s3, %s237
      %s239 = smul.u32 8, %s18
      %v241 = vld [vmem:[%s216] sm:$0xff]
      %v242 = vld [vmem:[%s216 + $0x8] sm:$0xf]
      %v245 = vcombine.high %v241, %v241
      %v247 = vcombine.low %v241, %v241
      %v248 = vcombine.low %v242, %v242
      %249 = vrot.lane.b32.xlu0 %v247, 127
      %v250 = vpop.permute.xlu0 %249
      %251 = vrot.lane.b32.xlu0 %v241, 127
      %v252 = vpop.permute.xlu0 %251
      %253 = vrot.lane.b32.xlu0 %v248, 127
      %v254 = vpop.permute.xlu0 %253
      %vm255 = vcmask 1039360
      %v256 = vsel %vm255, %v250, %v252
      %v257 = vsel %vm255, %v252, %v254
      %261 = vrot.lane.b32.xlu0 %v241, 126
      %v262 = vpop.permute.xlu0 %261
      %263 = vrot.lane.b32.xlu0 %v245, 126
      %v264 = vpop.permute.xlu0 %263
      %265 = vrot.lane.b32.xlu0 %v242, 126
      %v266 = vpop.permute.xlu0 %265
      %vm267 = vcmask 1031168
      %v268 = vsel %vm267, %v262, %v264
      %v269 = vsel %vm267, %v264, %v266
      %273 = vrot.lane.b32.xlu0 %v247, 110
      %v274 = vpop.permute.xlu0 %273
      %275 = vrot.lane.b32.xlu0 %v241, 110
      %v276 = vpop.permute.xlu0 %275
      %277 = vrot.lane.b32.xlu0 %v248, 110
      %v278 = vpop.permute.xlu0 %277
      %vm279 = vcmask 900096
      %v280 = vsel %vm279, %v274, %v276
      %v281 = vsel %vm279, %v276, %v278
      %285 = vrot.lane.b32.xlu0 %v241, 109
      %v286 = vpop.permute.xlu0 %285
      %287 = vrot.lane.b32.xlu0 %v245, 109
      %v288 = vpop.permute.xlu0 %287
      %289 = vrot.lane.b32.xlu0 %v242, 109
      %v290 = vpop.permute.xlu0 %289
      %vm291 = vcmask 891904
      %v292 = vsel %vm291, %v286, %v288
      %v293 = vsel %vm291, %v288, %v290
      %297 = vrot.lane.b32.xlu0 %v247, 108
      %v298 = vpop.permute.xlu0 %297
      %299 = vrot.lane.b32.xlu0 %v241, 108
      %v300 = vpop.permute.xlu0 %299
      %301 = vrot.lane.b32.xlu0 %v248, 108
      %v302 = vpop.permute.xlu0 %301
      %vm303 = vcmask 883712
      %v304 = vsel %vm303, %v298, %v300
      %v305 = vsel %vm303, %v300, %v302
      %309 = vrot.lane.b32.xlu0 %v241, 92
      %v310 = vpop.permute.xlu0 %309
      %311 = vrot.lane.b32.xlu0 %v245, 92
      %v312 = vpop.permute.xlu0 %311
      %313 = vrot.lane.b32.xlu0 %v242, 92
      %v314 = vpop.permute.xlu0 %313
      %vm315 = vcmask 752640
      %v316 = vsel %vm315, %v310, %v312
      %v317 = vsel %vm315, %v312, %v314
      %321 = vrot.lane.b32.xlu0 %v247, 91
      %v322 = vpop.permute.xlu0 %321
      %323 = vrot.lane.b32.xlu0 %v241, 91
      %v324 = vpop.permute.xlu0 %323
      %325 = vrot.lane.b32.xlu0 %v248, 91
      %v326 = vpop.permute.xlu0 %325
      %vm327 = vcmask 744448
      %v328 = vsel %vm327, %v322, %v324
      %v329 = vsel %vm327, %v324, %v326
      %333 = vrot.lane.b32.xlu0 %v241, 90
      %v334 = vpop.permute.xlu0 %333
      %335 = vrot.lane.b32.xlu0 %v245, 90
      %v336 = vpop.permute.xlu0 %335
      %337 = vrot.lane.b32.xlu0 %v242, 90
      %v338 = vpop.permute.xlu0 %337
      %vm339 = vcmask 736256
      %v340 = vsel %vm339, %v334, %v336
      %v341 = vsel %vm339, %v336, %v338
      %vm345 = vcmask 1043456
      %v346 = vsel %vm345, %v241, %v256
      %v347 = vsel %vm345, %v245, %v257
      %v348 = vsel %vm345, %v242, %v254
      %v349 = vsel %vm345, %v268, %v280
      %v350 = vsel %vm345, %v269, %v281
      %v351 = vsel %vm345, %v266, %v278
      %v352 = vsel %vm345, %v292, %v304
      %v353 = vsel %vm345, %v293, %v305
      %v354 = vsel %vm345, %v290, %v302
      %v355 = vsel %vm345, %v316, %v328
      %v356 = vsel %vm345, %v317, %v329
      %v357 = vsel %vm345, %v314, %v326
      %v358 = vpack.c.bf16 %v349, %v346
      %v359 = vpack.c.bf16 %v350, %v347
      %v360 = vpack.c.bf16 %v351, %v348
      %v361 = vpack.c.bf16 %v355, %v352
      %v362 = vpack.c.bf16 %v356, %v353
      %v363 = vpack.c.bf16 %v357, %v354
      %v364 = vpack.c.bf16 %v340, %v340
      %v365 = vpack.c.bf16 %v341, %v341
      %v366 = vpack.c.bf16 %v338, %v338
      %v367 = vld [vmem:[%s221] sm:$0xf]
      %v368 = vld [vmem:[%s221 + $0x4] sm:$0xf]
      %v369 = vld [vmem:[%s221 + $0x8] sm:$0xf]
      %v370 = vld [vmem:[%s221 + $0xc] sm:$0xf]
      %v371 = vld [vmem:[%s221 + $0x10] sm:$0xf]
      %v372 = vld [vmem:[%s221 + $0x14] sm:$0xf]
      %v373 = vld [vmem:[%s221 + $0x18] sm:$0xf]
      %v374 = vld [vmem:[%s221 + $0x1c] sm:$0xf]
      %v375 = vld [vmem:[%s227] sm:$0xff]
      %v376 = vld [vmem:[%s227 + $0x8] sm:$0xff]
      %v377 = vld [vmem:[%s227 + $0x10] sm:$0xff]
      %v378 = vld [vmem:[%s227 + $0x18] sm:$0xff]
      %v379 = vld [vmem:[%s227 + $0x20] sm:$0xff]
      %v380 = vld [vmem:[%s227 + $0x28] sm:$0xff]
      %v381 = vld [vmem:[%s227 + $0x30] sm:$0xff]
      %v382 = vld [vmem:[%s227 + $0x38] sm:$0xff]
      %384 = vset.pattern.permute.xlu0 0
      %385 = vperm.xlu0 %384, %v375
      %v386 = vpop.permute.xlu0 %385
      %389 = vset.pattern.permute.xlu0 0
      %390 = vperm.xlu0 %389, %v376
      %v391 = vpop.permute.xlu0 %390
      %394 = vset.pattern.permute.xlu0 0
      %395 = vperm.xlu0 %394, %v377
      %v396 = vpop.permute.xlu0 %395
      %399 = vset.pattern.permute.xlu0 0
      %400 = vperm.xlu0 %399, %v378
      %v401 = vpop.permute.xlu0 %400
      %404 = vset.pattern.permute.xlu0 0
      %405 = vperm.xlu0 %404, %v379
      %v406 = vpop.permute.xlu0 %405
      %409 = vset.pattern.permute.xlu0 0
      %410 = vperm.xlu0 %409, %v380
      %v411 = vpop.permute.xlu0 %410
      %414 = vset.pattern.permute.xlu0 0
      %415 = vperm.xlu0 %414, %v381
      %v416 = vpop.permute.xlu0 %415
      %419 = vset.pattern.permute.xlu0 0
      %420 = vperm.xlu0 %419, %v382
      %v421 = vpop.permute.xlu0 %420
      %v431 = vunpack.c.l.b16 %v367
      %v432 = vunpack.c.l.b16 %v368
      %v433 = vunpack.c.l.b16 %v369
      %v434 = vunpack.c.l.b16 %v370
      %v435 = vunpack.c.l.b16 %v371
      %v436 = vunpack.c.l.b16 %v372
      %v437 = vunpack.c.l.b16 %v373
      %v438 = vunpack.c.l.b16 %v374
      %v439 = vpack.c.b16 %v432, %v431
      %v440 = vpack.c.b16 %v434, %v433
      %v441 = vpack.c.b16 %v436, %v435
      %v442 = vpack.c.b16 %v438, %v437
      %vm443 = vcmask 293888
      %v445 = vsel %vm443, %v439, 0
      %v448 = vsel %vm443, %v440, 0
      %v451 = vsel %vm443, %v441, 0
      %v454 = vsel %vm443, %v442, 0
      %vm456 = vcmask 1041408
      %v458 = vsel %vm456, %v364, 0
      %v461 = vsel %vm456, %v365, 0
      %v464 = vsel %vm456, %v366, 0
      %466 = vmatprep.subr.bf16.mxu0 0
      %467 = vmatpush1.bf16.msra.mxu0 0
      %468 = vmatprep.subr.bf16.mxu0 0
      %469 = vmatpush1.bf16.msra.mxu0 0
      %470 = vmatprep.subr.bf16.mxu0 0
      %471 = vmatpush1.bf16.msra.mxu0 0
      %472 = vmatprep.subr.bf16.mxu0 0
      %473 = vmatpush1.bf16.msra.mxu0 0
      %474 = vmatprep.subr.bf16.mxu0 0
      %475 = vmatpush1.bf16.msra.mxu0 0
      %476 = vmatprep.subr.bf16.mxu0 %v461
      %477 = vmatpush1.bf16.msra.mxu0 %v458
      %478 = vmatprep.subr.bf16.mxu0 %v362
      %479 = vmatpush1.bf16.msra.mxu0 %v361
      %480 = vmatprep.subr.bf16.mxu0 %v359
      %481 = vmatpush1.bf16.msra.mxu0 %v358
      %482 = vmatprep.subr.bf16.mxu0 0
      %483 = vmatpush2.bf16.msra.mxu0 0
      %484 = vmatprep.subr.bf16.mxu0 0
      %485 = vmatpush2.bf16.msra.mxu0 0
      %486 = vmatprep.subr.bf16.mxu0 0
      %487 = vmatpush2.bf16.msra.mxu0 0
      %488 = vmatprep.subr.bf16.mxu0 0
      %489 = vmatpush2.bf16.msra.mxu0 0
      %490 = vmatprep.subr.bf16.mxu0 0
      %491 = vmatpush2.bf16.msra.mxu0 0
      %492 = vmatprep.subr.bf16.mxu0 0
      %493 = vmatpush2.bf16.msra.mxu0 0
      %494 = vmatprep.subr.bf16.mxu0 0
      %495 = vmatpush2.bf16.msra.mxu0 0
      %496 = vmatprep.subr.bf16.mxu0 0
      %497 = vmatpush2.bf16.msra.mxu0 0
      %498 = vmatprep.mubr.bf16.mxu0 0
      %499 = vmatmul.mubr.bf16.gmra.mxu0 %v445
      %v500 = vpop.f32.mrf.mxu0
      %v501 = vadd.f32 %v386, %v500
      %v502 = vpop.f32.mrf.mxu0
      %v503 = vadd.f32 %v386, %v502
      %v504 = vpop.f32.mrf.mxu0
      %v505 = vadd.f32 %v391, %v504
      %v506 = vpop.f32.mrf.mxu0
      %v507 = vadd.f32 %v391, %v506
      %508 = vmatprep.mubr.bf16.mxu0 0
      %509 = vmatmul.mubr.bf16.gmra.mxu0 %v448
      %v510 = vpop.f32.mrf.mxu0
      %v511 = vadd.f32 %v396, %v510
      %v512 = vpop.f32.mrf.mxu0
      %v513 = vadd.f32 %v396, %v512
      %v514 = vpop.f32.mrf.mxu0
      %v515 = vadd.f32 %v401, %v514
      %v516 = vpop.f32.mrf.mxu0
      %v517 = vadd.f32 %v401, %v516
      %518 = vmatprep.mubr.bf16.mxu0 0
      %519 = vmatmul.mubr.bf16.gmra.mxu0 %v451
      %v520 = vpop.f32.mrf.mxu0
      %v521 = vadd.f32 %v406, %v520
      %v522 = vpop.f32.mrf.mxu0
      %v523 = vadd.f32 %v406, %v522
      %v524 = vpop.f32.mrf.mxu0
      %v525 = vadd.f32 %v411, %v524
      %v526 = vpop.f32.mrf.mxu0
      %v527 = vadd.f32 %v411, %v526
      %528 = vmatprep.mubr.bf16.mxu0 0
      %529 = vmatmul.mubr.bf16.gmra.mxu0 %v454
      %v530 = vpop.f32.mrf.mxu0
      %v531 = vadd.f32 %v416, %v530
      %v532 = vpop.f32.mrf.mxu0
      %v533 = vadd.f32 %v416, %v532
      %v534 = vpop.f32.mrf.mxu0
      %v535 = vadd.f32 %v421, %v534
      %v536 = vpop.f32.mrf.mxu0
      %v537 = vadd.f32 %v421, %v536
      %538 = vdwg.mxu0
      %539 = vmatprep.subr.bf16.mxu0 0
      %540 = vmatpush1.bf16.msra.mxu0 0
      %541 = vmatprep.subr.bf16.mxu0 0
      %542 = vmatpush1.bf16.msra.mxu0 0
      %543 = vmatprep.subr.bf16.mxu0 0
      %544 = vmatpush1.bf16.msra.mxu0 0
      %545 = vmatprep.subr.bf16.mxu0 0
      %546 = vmatpush1.bf16.msra.mxu0 0
      %547 = vmatprep.subr.bf16.mxu0 0
      %548 = vmatpush1.bf16.msra.mxu0 0
      %549 = vmatprep.subr.bf16.mxu0 0
      %550 = vmatpush1.bf16.msra.mxu0 %v464
      %551 = vmatprep.subr.bf16.mxu0 0
      %552 = vmatpush1.bf16.msra.mxu0 %v363
      %553 = vmatprep.subr.bf16.mxu0 0
      %554 = vmatpush1.bf16.msra.mxu0 %v360
      %555 = vmatprep.subr.bf16.mxu0 0
      %556 = vmatpush2.bf16.msra.mxu0 0
      %557 = vmatprep.subr.bf16.mxu0 0
      %558 = vmatpush2.bf16.msra.mxu0 0
      %559 = vmatprep.subr.bf16.mxu0 0
      %560 = vmatpush2.bf16.msra.mxu0 0
      %561 = vmatprep.subr.bf16.mxu0 0
      %562 = vmatpush2.bf16.msra.mxu0 0
      %563 = vmatprep.subr.bf16.mxu0 0
      %564 = vmatpush2.bf16.msra.mxu0 0
      %565 = vmatprep.subr.bf16.mxu0 0
      %566 = vmatpush2.bf16.msra.mxu0 0
      %567 = vmatprep.subr.bf16.mxu0 0
      %568 = vmatpush2.bf16.msra.mxu0 0
      %569 = vmatprep.subr.bf16.mxu0 0
      %570 = vmatpush2.bf16.msra.mxu0 0
      %571 = vmatprep.mubr.bf16.mxu0 0
      %572 = vmatmul.mubr.bf16.gmra.mxu0 %v445
      %v573 = vpop.f32.mrf.mxu0
      %v574 = vadd.f32 %v386, %v573
      %v575 = vpop.f32.mrf.mxu0
      %v576 = vpop.f32.mrf.mxu0
      %v577 = vadd.f32 %v391, %v576
      %v578 = vpop.f32.mrf.mxu0
      %579 = vmatprep.mubr.bf16.mxu0 0
      %580 = vmatmul.mubr.bf16.gmra.mxu0 %v448
      %v581 = vpop.f32.mrf.mxu0
      %v582 = vadd.f32 %v396, %v581
      %v583 = vpop.f32.mrf.mxu0
      %v584 = vpop.f32.mrf.mxu0
      %v585 = vadd.f32 %v401, %v584
      %v586 = vpop.f32.mrf.mxu0
      %587 = vmatprep.mubr.bf16.mxu0 0
      %588 = vmatmul.mubr.bf16.gmra.mxu0 %v451
      %v589 = vpop.f32.mrf.mxu0
      %v590 = vadd.f32 %v406, %v589
      %v591 = vpop.f32.mrf.mxu0
      %v592 = vpop.f32.mrf.mxu0
      %v593 = vadd.f32 %v411, %v592
      %v594 = vpop.f32.mrf.mxu0
      %595 = vmatprep.mubr.bf16.mxu0 0
      %596 = vmatmul.mubr.bf16.gmra.mxu0 %v454
      %v597 = vpop.f32.mrf.mxu0
      %v598 = vadd.f32 %v416, %v597
      %v599 = vpop.f32.mrf.mxu0
      %v600 = vpop.f32.mrf.mxu0
      %v601 = vadd.f32 %v421, %v600
      %v602 = vpop.f32.mrf.mxu0
      %603 = vdwg.mxu0
      %v604 = vmax.f32 %v501, 0.0
      %v605 = vmax.f32 %v503, 0.0
      %v606 = vmax.f32 %v574, 0.0
      %v607 = vmax.f32 %v505, 0.0
      %v608 = vmax.f32 %v507, 0.0
      %v609 = vmax.f32 %v577, 0.0
      %v610 = vmax.f32 %v511, 0.0
      %v611 = vmax.f32 %v513, 0.0
      %v612 = vmax.f32 %v582, 0.0
      %v613 = vmax.f32 %v515, 0.0
      %v614 = vmax.f32 %v517, 0.0
      %v615 = vmax.f32 %v585, 0.0
      %v616 = vmax.f32 %v521, 0.0
      %v617 = vmax.f32 %v523, 0.0
      %v618 = vmax.f32 %v590, 0.0
      %v619 = vmax.f32 %v525, 0.0
      %v620 = vmax.f32 %v527, 0.0
      %v621 = vmax.f32 %v593, 0.0
      %v622 = vmax.f32 %v531, 0.0
      %v623 = vmax.f32 %v533, 0.0
      %v624 = vmax.f32 %v598, 0.0
      %v625 = vmax.f32 %v535, 0.0
      %v626 = vmax.f32 %v537, 0.0
      %v627 = vmax.f32 %v601, 0.0
      %v628 = vpack.c.bf16 %v607, %v604
      %v629 = vpack.c.bf16 %v608, %v605
      %v630 = vpack.c.bf16 %v609, %v606
      %v631 = vpack.c.bf16 %v613, %v610
      %v632 = vpack.c.bf16 %v614, %v611
      %v633 = vpack.c.bf16 %v615, %v612
      %v634 = vpack.c.bf16 %v619, %v616
      %v635 = vpack.c.bf16 %v620, %v617
      %v636 = vpack.c.bf16 %v621, %v618
      %v637 = vpack.c.bf16 %v625, %v622
      %v638 = vpack.c.bf16 %v626, %v623
      %v639 = vpack.c.bf16 %v627, %v624
      %v644 = vunpack.c.l.b16 %v628
      %v645 = vunpack.c.h.b16 %v628
      %v646 = vunpack.c.l.b16 %v631
      %v647 = vunpack.c.h.b16 %v631
      %v648 = vunpack.c.l.b16 %v634
      %v649 = vunpack.c.h.b16 %v634
      %v650 = vunpack.c.l.b16 %v637
      %v651 = vunpack.c.h.b16 %v637
      %v652 = vpack.c.b16 %v644, %v644
      %v653 = vpack.c.b16 %v645, %v645
      %v654 = vpack.c.b16 %v646, %v646
      %v655 = vpack.c.b16 %v647, %v647
      %v656 = vpack.c.b16 %v648, %v648
      %v657 = vpack.c.b16 %v649, %v649
      %v658 = vpack.c.b16 %v650, %v650
      %v659 = vpack.c.b16 %v651, %v651
      %vm668 = vcmask 125952
      %669 = vst.msk [vmem:[%s238] sm:$0xf] %vm668, %v652
      %670 = vst.msk [vmem:[%s238 + $0x8] sm:$0xf] %vm668, %v653
      %671 = vst.msk [vmem:[%s238 + $0x10] sm:$0xf] %vm668, %v654
      %672 = vst.msk [vmem:[%s238 + $0x18] sm:$0xf] %vm668, %v655
      %673 = vst.msk [vmem:[%s238 + $0x20] sm:$0xf] %vm668, %v656
      %674 = vst.msk [vmem:[%s238 + $0x28] sm:$0xf] %vm668, %v657
      %675 = vst.msk [vmem:[%s238 + $0x30] sm:$0xf] %vm668, %v658
      %676 = vst.msk [vmem:[%s238 + $0x38] sm:$0xf] %vm668, %v659
      %677 = vrot.lane.b32.xlu0 %v652, 126
      %v678 = vpop.permute.xlu0 %677
      %679 = vrot.lane.b32.xlu0 %v653, 126
      %v680 = vpop.permute.xlu0 %679
      %681 = vrot.lane.b32.xlu0 %v654, 126
      %v682 = vpop.permute.xlu0 %681
      %683 = vrot.lane.b32.xlu0 %v655, 126
      %v684 = vpop.permute.xlu0 %683
      %685 = vrot.lane.b32.xlu0 %v656, 126
      %v686 = vpop.permute.xlu0 %685
      %687 = vrot.lane.b32.xlu0 %v657, 126
      %v688 = vpop.permute.xlu0 %687
      %689 = vrot.lane.b32.xlu0 %v658, 126
      %v690 = vpop.permute.xlu0 %689
      %691 = vrot.lane.b32.xlu0 %v659, 126
      %v692 = vpop.permute.xlu0 %691
      %vm701 = vcmask 257152
      %702 = vst.msk [vmem:[%s238] sm:$0xf] %vm701, %v678
      %703 = vst.msk [vmem:[%s238 + $0x8] sm:$0xf] %vm701, %v680
      %704 = vst.msk [vmem:[%s238 + $0x10] sm:$0xf] %vm701, %v682
      %705 = vst.msk [vmem:[%s238 + $0x18] sm:$0xf] %vm701, %v684
      %706 = vst.msk [vmem:[%s238 + $0x20] sm:$0xf] %vm701, %v686
      %707 = vst.msk [vmem:[%s238 + $0x28] sm:$0xf] %vm701, %v688
      %708 = vst.msk [vmem:[%s238 + $0x30] sm:$0xf] %vm701, %v690
      %709 = vst.msk [vmem:[%s238 + $0x38] sm:$0xf] %vm701, %v692
      %710 = vrot.lane.b32.xlu0 %v652, 124
      %v711 = vpop.permute.xlu0 %710
      %712 = vrot.lane.b32.xlu0 %v653, 124
      %v713 = vpop.permute.xlu0 %712
      %714 = vrot.lane.b32.xlu0 %v654, 124
      %v715 = vpop.permute.xlu0 %714
      %716 = vrot.lane.b32.xlu0 %v655, 124
      %v717 = vpop.permute.xlu0 %716
      %718 = vrot.lane.b32.xlu0 %v656, 124
      %v719 = vpop.permute.xlu0 %718
      %720 = vrot.lane.b32.xlu0 %v657, 124
      %v721 = vpop.permute.xlu0 %720
      %722 = vrot.lane.b32.xlu0 %v658, 124
      %v723 = vpop.permute.xlu0 %722
      %724 = vrot.lane.b32.xlu0 %v659, 124
      %v725 = vpop.permute.xlu0 %724
      %vm734 = vcmask 388352
      %735 = vst.msk [vmem:[%s238] sm:$0xf] %vm734, %v711
      %736 = vst.msk [vmem:[%s238 + $0x8] sm:$0xf] %vm734, %v713
      %737 = vst.msk [vmem:[%s238 + $0x10] sm:$0xf] %vm734, %v715
      %738 = vst.msk [vmem:[%s238 + $0x18] sm:$0xf] %vm734, %v717
      %739 = vst.msk [vmem:[%s238 + $0x20] sm:$0xf] %vm734, %v719
      %740 = vst.msk [vmem:[%s238 + $0x28] sm:$0xf] %vm734, %v721
      %741 = vst.msk [vmem:[%s238 + $0x30] sm:$0xf] %vm734, %v723
      %742 = vst.msk [vmem:[%s238 + $0x38] sm:$0xf] %vm734, %v725
      %743 = vrot.lane.b32.xlu0 %v652, 122
      %v744 = vpop.permute.xlu0 %743
      %745 = vrot.lane.b32.xlu0 %v653, 122
      %v746 = vpop.permute.xlu0 %745
      %747 = vrot.lane.b32.xlu0 %v654, 122
      %v748 = vpop.permute.xlu0 %747
      %749 = vrot.lane.b32.xlu0 %v655, 122
      %v750 = vpop.permute.xlu0 %749
      %751 = vrot.lane.b32.xlu0 %v656, 122
      %v752 = vpop.permute.xlu0 %751
      %753 = vrot.lane.b32.xlu0 %v657, 122
      %v754 = vpop.permute.xlu0 %753
      %755 = vrot.lane.b32.xlu0 %v658, 122
      %v756 = vpop.permute.xlu0 %755
      %757 = vrot.lane.b32.xlu0 %v659, 122
      %v758 = vpop.permute.xlu0 %757
      %vm767 = vcmask 519552
      %768 = vst.msk [vmem:[%s238] sm:$0xf] %vm767, %v744
      %769 = vst.msk [vmem:[%s238 + $0x8] sm:$0xf] %vm767, %v746
      %770 = vst.msk [vmem:[%s238 + $0x10] sm:$0xf] %vm767, %v748
      %771 = vst.msk [vmem:[%s238 + $0x18] sm:$0xf] %vm767, %v750
      %772 = vst.msk [vmem:[%s238 + $0x20] sm:$0xf] %vm767, %v752
      %773 = vst.msk [vmem:[%s238 + $0x28] sm:$0xf] %vm767, %v754
      %774 = vst.msk [vmem:[%s238 + $0x30] sm:$0xf] %vm767, %v756
      %775 = vst.msk [vmem:[%s238 + $0x38] sm:$0xf] %vm767, %v758
      %776 = vrot.lane.b32.xlu0 %v652, 120
      %v777 = vpop.permute.xlu0 %776
      %778 = vrot.lane.b32.xlu0 %v653, 120
      %v779 = vpop.permute.xlu0 %778
      %780 = vrot.lane.b32.xlu0 %v654, 120
      %v781 = vpop.permute.xlu0 %780
      %782 = vrot.lane.b32.xlu0 %v655, 120
      %v783 = vpop.permute.xlu0 %782
      %784 = vrot.lane.b32.xlu0 %v656, 120
      %v785 = vpop.permute.xlu0 %784
      %786 = vrot.lane.b32.xlu0 %v657, 120
      %v787 = vpop.permute.xlu0 %786
      %788 = vrot.lane.b32.xlu0 %v658, 120
      %v789 = vpop.permute.xlu0 %788
      %790 = vrot.lane.b32.xlu0 %v659, 120
      %v791 = vpop.permute.xlu0 %790
      %vm800 = vcmask 650752
      %801 = vst.msk [vmem:[%s238] sm:$0xf] %vm800, %v777
      %802 = vst.msk [vmem:[%s238 + $0x8] sm:$0xf] %vm800, %v779
      %803 = vst.msk [vmem:[%s238 + $0x10] sm:$0xf] %vm800, %v781
      %804 = vst.msk [vmem:[%s238 + $0x18] sm:$0xf] %vm800, %v783
      %805 = vst.msk [vmem:[%s238 + $0x20] sm:$0xf] %vm800, %v785
      %806 = vst.msk [vmem:[%s238 + $0x28] sm:$0xf] %vm800, %v787
      %807 = vst.msk [vmem:[%s238 + $0x30] sm:$0xf] %vm800, %v789
      %808 = vst.msk [vmem:[%s238 + $0x38] sm:$0xf] %vm800, %v791
      %809 = vrot.lane.b32.xlu0 %v652, 118
      %v810 = vpop.permute.xlu0 %809
      %811 = vrot.lane.b32.xlu0 %v653, 118
      %v812 = vpop.permute.xlu0 %811
      %813 = vrot.lane.b32.xlu0 %v654, 118
      %v814 = vpop.permute.xlu0 %813
      %815 = vrot.lane.b32.xlu0 %v655, 118
      %v816 = vpop.permute.xlu0 %815
      %817 = vrot.lane.b32.xlu0 %v656, 118
      %v818 = vpop.permute.xlu0 %817
      %819 = vrot.lane.b32.xlu0 %v657, 118
      %v820 = vpop.permute.xlu0 %819
      %821 = vrot.lane.b32.xlu0 %v658, 118
      %v822 = vpop.permute.xlu0 %821
      %823 = vrot.lane.b32.xlu0 %v659, 118
      %v824 = vpop.permute.xlu0 %823
      %vm833 = vcmask 781952
      %834 = vst.msk [vmem:[%s238] sm:$0xf] %vm833, %v810
      %835 = vst.msk [vmem:[%s238 + $0x8] sm:$0xf] %vm833, %v812
      %836 = vst.msk [vmem:[%s238 + $0x10] sm:$0xf] %vm833, %v814
      %837 = vst.msk [vmem:[%s238 + $0x18] sm:$0xf] %vm833, %v816
      %838 = vst.msk [vmem:[%s238 + $0x20] sm:$0xf] %vm833, %v818
      %839 = vst.msk [vmem:[%s238 + $0x28] sm:$0xf] %vm833, %v820
      %840 = vst.msk [vmem:[%s238 + $0x30] sm:$0xf] %vm833, %v822
      %841 = vst.msk [vmem:[%s238 + $0x38] sm:$0xf] %vm833, %v824
      %842 = vrot.lane.b32.xlu0 %v652, 116
      %v843 = vpop.permute.xlu0 %842
      %844 = vrot.lane.b32.xlu0 %v653, 116
      %v845 = vpop.permute.xlu0 %844
      %846 = vrot.lane.b32.xlu0 %v654, 116
      %v847 = vpop.permute.xlu0 %846
      %848 = vrot.lane.b32.xlu0 %v655, 116
      %v849 = vpop.permute.xlu0 %848
      %850 = vrot.lane.b32.xlu0 %v656, 116
      %v851 = vpop.permute.xlu0 %850
      %852 = vrot.lane.b32.xlu0 %v657, 116
      %v853 = vpop.permute.xlu0 %852
      %854 = vrot.lane.b32.xlu0 %v658, 116
      %v855 = vpop.permute.xlu0 %854
      %856 = vrot.lane.b32.xlu0 %v659, 116
      %v857 = vpop.permute.xlu0 %856
      %vm866 = vcmask 913152
      %867 = vst.msk [vmem:[%s238] sm:$0xf] %vm866, %v843
      %868 = vst.msk [vmem:[%s238 + $0x8] sm:$0xf] %vm866, %v845
      %869 = vst.msk [vmem:[%s238 + $0x10] sm:$0xf] %vm866, %v847
      %870 = vst.msk [vmem:[%s238 + $0x18] sm:$0xf] %vm866, %v849
      %871 = vst.msk [vmem:[%s238 + $0x20] sm:$0xf] %vm866, %v851
      %872 = vst.msk [vmem:[%s238 + $0x28] sm:$0xf] %vm866, %v853
      %873 = vst.msk [vmem:[%s238 + $0x30] sm:$0xf] %vm866, %v855
      %874 = vst.msk [vmem:[%s238 + $0x38] sm:$0xf] %vm866, %v857
      %v879 = vunpack.c.l.b16 %v629
      %v880 = vunpack.c.h.b16 %v629
      %v881 = vunpack.c.l.b16 %v632
      %v882 = vunpack.c.h.b16 %v632
      %v883 = vunpack.c.l.b16 %v635
      %v884 = vunpack.c.h.b16 %v635
      %v885 = vunpack.c.l.b16 %v638
      %v886 = vunpack.c.h.b16 %v638
      %v887 = vpack.c.b16 %v879, %v644
      %v888 = vpack.c.b16 %v880, %v645
      %v889 = vpack.c.b16 %v881, %v646
      %v890 = vpack.c.b16 %v882, %v647
      %v891 = vpack.c.b16 %v883, %v648
      %v892 = vpack.c.b16 %v884, %v649
      %v893 = vpack.c.b16 %v885, %v650
      %v894 = vpack.c.b16 %v886, %v651
      %895 = vrot.lane.b32.xlu0 %v887, 114
      %v896 = vpop.permute.xlu0 %895
      %897 = vrot.lane.b32.xlu0 %v888, 114
      %v898 = vpop.permute.xlu0 %897
      %899 = vrot.lane.b32.xlu0 %v889, 114
      %v900 = vpop.permute.xlu0 %899
      %901 = vrot.lane.b32.xlu0 %v890, 114
      %v902 = vpop.permute.xlu0 %901
      %903 = vrot.lane.b32.xlu0 %v891, 114
      %v904 = vpop.permute.xlu0 %903
      %905 = vrot.lane.b32.xlu0 %v892, 114
      %v906 = vpop.permute.xlu0 %905
      %907 = vrot.lane.b32.xlu0 %v893, 114
      %v908 = vpop.permute.xlu0 %907
      %909 = vrot.lane.b32.xlu0 %v894, 114
      %v910 = vpop.permute.xlu0 %909
      %v911 = vrot.slane %v896, 4
      %v912 = vrot.slane %v898, 4
      %v913 = vrot.slane %v900, 4
      %v914 = vrot.slane %v902, 4
      %v915 = vrot.slane %v904, 4
      %v916 = vrot.slane %v906, 4
      %v917 = vrot.slane %v908, 4
      %v918 = vrot.slane %v910, 4
      %vm919 = vcmask 932864
      %v920 = vsel %vm919, %v896, %v911
      %v921 = vsel %vm919, %v898, %v912
      %v922 = vsel %vm919, %v900, %v913
      %v923 = vsel %vm919, %v902, %v914
      %v924 = vsel %vm919, %v904, %v915
      %v925 = vsel %vm919, %v906, %v916
      %v926 = vsel %vm919, %v908, %v917
      %v927 = vsel %vm919, %v910, %v918
      %vm936 = vcmask 1044352
      %937 = vst.msk [vmem:[%s238] sm:$0xf] %vm936, %v920
      %938 = vst.msk [vmem:[%s238 + $0x8] sm:$0xf] %vm936, %v921
      %939 = vst.msk [vmem:[%s238 + $0x10] sm:$0xf] %vm936, %v922
      %940 = vst.msk [vmem:[%s238 + $0x18] sm:$0xf] %vm936, %v923
      %941 = vst.msk [vmem:[%s238 + $0x20] sm:$0xf] %vm936, %v924
      %942 = vst.msk [vmem:[%s238 + $0x28] sm:$0xf] %vm936, %v925
      %943 = vst.msk [vmem:[%s238 + $0x30] sm:$0xf] %vm936, %v926
      %944 = vst.msk [vmem:[%s238 + $0x38] sm:$0xf] %vm936, %v927
      %v945 = vpack.c.b16 %v879, %v879
      %v946 = vpack.c.b16 %v880, %v880
      %v947 = vpack.c.b16 %v881, %v881
      %v948 = vpack.c.b16 %v882, %v882
      %v949 = vpack.c.b16 %v883, %v883
      %v950 = vpack.c.b16 %v884, %v884
      %v951 = vpack.c.b16 %v885, %v885
      %v952 = vpack.c.b16 %v886, %v886
      %953 = vrot.lane.b32.xlu0 %v945, 112
      %v954 = vpop.permute.xlu0 %953
      %955 = vrot.lane.b32.xlu0 %v946, 112
      %v956 = vpop.permute.xlu0 %955
      %957 = vrot.lane.b32.xlu0 %v947, 112
      %v958 = vpop.permute.xlu0 %957
      %959 = vrot.lane.b32.xlu0 %v948, 112
      %v960 = vpop.permute.xlu0 %959
      %961 = vrot.lane.b32.xlu0 %v949, 112
      %v962 = vpop.permute.xlu0 %961
      %963 = vrot.lane.b32.xlu0 %v950, 112
      %v964 = vpop.permute.xlu0 %963
      %965 = vrot.lane.b32.xlu0 %v951, 112
      %v966 = vpop.permute.xlu0 %965
      %967 = vrot.lane.b32.xlu0 %v952, 112
      %v968 = vpop.permute.xlu0 %967
      %977 = vst.msk [vmem:[%s238 + $0x4] sm:$0xf] %vm668, %v954
      %978 = vst.msk [vmem:[%s238 + $0xc] sm:$0xf] %vm668, %v956
      %979 = vst.msk [vmem:[%s238 + $0x14] sm:$0xf] %vm668, %v958
      %980 = vst.msk [vmem:[%s238 + $0x1c] sm:$0xf] %vm668, %v960
      %981 = vst.msk [vmem:[%s238 + $0x24] sm:$0xf] %vm668, %v962
      %982 = vst.msk [vmem:[%s238 + $0x2c] sm:$0xf] %vm668, %v964
      %983 = vst.msk [vmem:[%s238 + $0x34] sm:$0xf] %vm668, %v966
      %984 = vst.msk [vmem:[%s238 + $0x3c] sm:$0xf] %vm668, %v968
      %985 = vrot.lane.b32.xlu0 %v945, 110
      %v986 = vpop.permute.xlu0 %985
      %987 = vrot.lane.b32.xlu0 %v946, 110
      %v988 = vpop.permute.xlu0 %987
      %989 = vrot.lane.b32.xlu0 %v947, 110
      %v990 = vpop.permute.xlu0 %989
      %991 = vrot.lane.b32.xlu0 %v948, 110
      %v992 = vpop.permute.xlu0 %991
      %993 = vrot.lane.b32.xlu0 %v949, 110
      %v994 = vpop.permute.xlu0 %993
      %995 = vrot.lane.b32.xlu0 %v950, 110
      %v996 = vpop.permute.xlu0 %995
      %997 = vrot.lane.b32.xlu0 %v951, 110
      %v998 = vpop.permute.xlu0 %997
      %999 = vrot.lane.b32.xlu0 %v952, 110
      %v1000 = vpop.permute.xlu0 %999
      %1009 = vst.msk [vmem:[%s238 + $0x4] sm:$0xf] %vm701, %v986
      %1010 = vst.msk [vmem:[%s238 + $0xc] sm:$0xf] %vm701, %v988
      %1011 = vst.msk [vmem:[%s238 + $0x14] sm:$0xf] %vm701, %v990
      %1012 = vst.msk [vmem:[%s238 + $0x1c] sm:$0xf] %vm701, %v992
      %1013 = vst.msk [vmem:[%s238 + $0x24] sm:$0xf] %vm701, %v994
      %1014 = vst.msk [vmem:[%s238 + $0x2c] sm:$0xf] %vm701, %v996
      %1015 = vst.msk [vmem:[%s238 + $0x34] sm:$0xf] %vm701, %v998
      %1016 = vst.msk [vmem:[%s238 + $0x3c] sm:$0xf] %vm701, %v1000
      %1017 = vrot.lane.b32.xlu0 %v945, 108
      %v1018 = vpop.permute.xlu0 %1017
      %1019 = vrot.lane.b32.xlu0 %v946, 108
      %v1020 = vpop.permute.xlu0 %1019
      %1021 = vrot.lane.b32.xlu0 %v947, 108
      %v1022 = vpop.permute.xlu0 %1021
      %1023 = vrot.lane.b32.xlu0 %v948, 108
      %v1024 = vpop.permute.xlu0 %1023
      %1025 = vrot.lane.b32.xlu0 %v949, 108
      %v1026 = vpop.permute.xlu0 %1025
      %1027 = vrot.lane.b32.xlu0 %v950, 108
      %v1028 = vpop.permute.xlu0 %1027
      %1029 = vrot.lane.b32.xlu0 %v951, 108
      %v1030 = vpop.permute.xlu0 %1029
      %1031 = vrot.lane.b32.xlu0 %v952, 108
      %v1032 = vpop.permute.xlu0 %1031
      %1041 = vst.msk [vmem:[%s238 + $0x4] sm:$0xf] %vm734, %v1018
      %1042 = vst.msk [vmem:[%s238 + $0xc] sm:$0xf] %vm734, %v1020
      %1043 = vst.msk [vmem:[%s238 + $0x14] sm:$0xf] %vm734, %v1022
      %1044 = vst.msk [vmem:[%s238 + $0x1c] sm:$0xf] %vm734, %v1024
      %1045 = vst.msk [vmem:[%s238 + $0x24] sm:$0xf] %vm734, %v1026
      %1046 = vst.msk [vmem:[%s238 + $0x2c] sm:$0xf] %vm734, %v1028
      %1047 = vst.msk [vmem:[%s238 + $0x34] sm:$0xf] %vm734, %v1030
      %1048 = vst.msk [vmem:[%s238 + $0x3c] sm:$0xf] %vm734, %v1032
      %1049 = vrot.lane.b32.xlu0 %v945, 106
      %v1050 = vpop.permute.xlu0 %1049
      %1051 = vrot.lane.b32.xlu0 %v946, 106
      %v1052 = vpop.permute.xlu0 %1051
      %1053 = vrot.lane.b32.xlu0 %v947, 106
      %v1054 = vpop.permute.xlu0 %1053
      %1055 = vrot.lane.b32.xlu0 %v948, 106
      %v1056 = vpop.permute.xlu0 %1055
      %1057 = vrot.lane.b32.xlu0 %v949, 106
      %v1058 = vpop.permute.xlu0 %1057
      %1059 = vrot.lane.b32.xlu0 %v950, 106
      %v1060 = vpop.permute.xlu0 %1059
      %1061 = vrot.lane.b32.xlu0 %v951, 106
      %v1062 = vpop.permute.xlu0 %1061
      %1063 = vrot.lane.b32.xlu0 %v952, 106
      %v1064 = vpop.permute.xlu0 %1063
      %1073 = vst.msk [vmem:[%s238 + $0x4] sm:$0xf] %vm767, %v1050
      %1074 = vst.msk [vmem:[%s238 + $0xc] sm:$0xf] %vm767, %v1052
      %1075 = vst.msk [vmem:[%s238 + $0x14] sm:$0xf] %vm767, %v1054
      %1076 = vst.msk [vmem:[%s238 + $0x1c] sm:$0xf] %vm767, %v1056
      %1077 = vst.msk [vmem:[%s238 + $0x24] sm:$0xf] %vm767, %v1058
      %1078 = vst.msk [vmem:[%s238 + $0x2c] sm:$0xf] %vm767, %v1060
      %1079 = vst.msk [vmem:[%s238 + $0x34] sm:$0xf] %vm767, %v1062
      %1080 = vst.msk [vmem:[%s238 + $0x3c] sm:$0xf] %vm767, %v1064
      %1081 = vrot.lane.b32.xlu0 %v945, 104
      %v1082 = vpop.permute.xlu0 %1081
      %1083 = vrot.lane.b32.xlu0 %v946, 104
      %v1084 = vpop.permute.xlu0 %1083
      %1085 = vrot.lane.b32.xlu0 %v947, 104
      %v1086 = vpop.permute.xlu0 %1085
      %1087 = vrot.lane.b32.xlu0 %v948, 104
      %v1088 = vpop.permute.xlu0 %1087
      %1089 = vrot.lane.b32.xlu0 %v949, 104
      %v1090 = vpop.permute.xlu0 %1089
      %1091 = vrot.lane.b32.xlu0 %v950, 104
      %v1092 = vpop.permute.xlu0 %1091
      %1093 = vrot.lane.b32.xlu0 %v951, 104
      %v1094 = vpop.permute.xlu0 %1093
      %1095 = vrot.lane.b32.xlu0 %v952, 104
      %v1096 = vpop.permute.xlu0 %1095
      %1105 = vst.msk [vmem:[%s238 + $0x4] sm:$0xf] %vm800, %v1082
      %1106 = vst.msk [vmem:[%s238 + $0xc] sm:$0xf] %vm800, %v1084
      %1107 = vst.msk [vmem:[%s238 + $0x14] sm:$0xf] %vm800, %v1086
      %1108 = vst.msk [vmem:[%s238 + $0x1c] sm:$0xf] %vm800, %v1088
      %1109 = vst.msk [vmem:[%s238 + $0x24] sm:$0xf] %vm800, %v1090
      %1110 = vst.msk [vmem:[%s238 + $0x2c] sm:$0xf] %vm800, %v1092
      %1111 = vst.msk [vmem:[%s238 + $0x34] sm:$0xf] %vm800, %v1094
      %1112 = vst.msk [vmem:[%s238 + $0x3c] sm:$0xf] %vm800, %v1096
      %1113 = vrot.lane.b32.xlu0 %v945, 102
      %v1114 = vpop.permute.xlu0 %1113
      %1115 = vrot.lane.b32.xlu0 %v946, 102
      %v1116 = vpop.permute.xlu0 %1115
      %1117 = vrot.lane.b32.xlu0 %v947, 102
      %v1118 = vpop.permute.xlu0 %1117
      %1119 = vrot.lane.b32.xlu0 %v948, 102
      %v1120 = vpop.permute.xlu0 %1119
      %1121 = vrot.lane.b32.xlu0 %v949, 102
      %v1122 = vpop.permute.xlu0 %1121
      %1123 = vrot.lane.b32.xlu0 %v950, 102
      %v1124 = vpop.permute.xlu0 %1123
      %1125 = vrot.lane.b32.xlu0 %v951, 102
      %v1126 = vpop.permute.xlu0 %1125
      %1127 = vrot.lane.b32.xlu0 %v952, 102
      %v1128 = vpop.permute.xlu0 %1127
      %1137 = vst.msk [vmem:[%s238 + $0x4] sm:$0xf] %vm833, %v1114
      %1138 = vst.msk [vmem:[%s238 + $0xc] sm:$0xf] %vm833, %v1116
      %1139 = vst.msk [vmem:[%s238 + $0x14] sm:$0xf] %vm833, %v1118
      %1140 = vst.msk [vmem:[%s238 + $0x1c] sm:$0xf] %vm833, %v1120
      %1141 = vst.msk [vmem:[%s238 + $0x24] sm:$0xf] %vm833, %v1122
      %1142 = vst.msk [vmem:[%s238 + $0x2c] sm:$0xf] %vm833, %v1124
      %1143 = vst.msk [vmem:[%s238 + $0x34] sm:$0xf] %vm833, %v1126
      %1144 = vst.msk [vmem:[%s238 + $0x3c] sm:$0xf] %vm833, %v1128
      %v1149 = vunpack.c.l.b16 %v630
      %v1150 = vunpack.c.h.b16 %v630
      %v1151 = vunpack.c.l.b16 %v633
      %v1152 = vunpack.c.h.b16 %v633
      %v1153 = vunpack.c.l.b16 %v636
      %v1154 = vunpack.c.h.b16 %v636
      %v1155 = vunpack.c.l.b16 %v639
      %v1156 = vunpack.c.h.b16 %v639
      %v1157 = vpack.c.b16 %v1149, %v879
      %v1158 = vpack.c.b16 %v1150, %v880
      %v1159 = vpack.c.b16 %v1151, %v881
      %v1160 = vpack.c.b16 %v1152, %v882
      %v1161 = vpack.c.b16 %v1153, %v883
      %v1162 = vpack.c.b16 %v1154, %v884
      %v1163 = vpack.c.b16 %v1155, %v885
      %v1164 = vpack.c.b16 %v1156, %v886
      %1165 = vrot.lane.b32.xlu0 %v1157, 100
      %v1166 = vpop.permute.xlu0 %1165
      %1167 = vrot.lane.b32.xlu0 %v1158, 100
      %v1168 = vpop.permute.xlu0 %1167
      %1169 = vrot.lane.b32.xlu0 %v1159, 100
      %v1170 = vpop.permute.xlu0 %1169
      %1171 = vrot.lane.b32.xlu0 %v1160, 100
      %v1172 = vpop.permute.xlu0 %1171
      %1173 = vrot.lane.b32.xlu0 %v1161, 100
      %v1174 = vpop.permute.xlu0 %1173
      %1175 = vrot.lane.b32.xlu0 %v1162, 100
      %v1176 = vpop.permute.xlu0 %1175
      %1177 = vrot.lane.b32.xlu0 %v1163, 100
      %v1178 = vpop.permute.xlu0 %1177
      %1179 = vrot.lane.b32.xlu0 %v1164, 100
      %v1180 = vpop.permute.xlu0 %1179
      %v1181 = vrot.slane %v1166, 4
      %v1182 = vrot.slane %v1168, 4
      %v1183 = vrot.slane %v1170, 4
      %v1184 = vrot.slane %v1172, 4
      %v1185 = vrot.slane %v1174, 4
      %v1186 = vrot.slane %v1176, 4
      %v1187 = vrot.slane %v1178, 4
      %v1188 = vrot.slane %v1180, 4
      %vm1189 = vcmask 818176
      %v1190 = vsel %vm1189, %v1166, %v1181
      %v1191 = vsel %vm1189, %v1168, %v1182
      %v1192 = vsel %vm1189, %v1170, %v1183
      %v1193 = vsel %vm1189, %v1172, %v1184
      %v1194 = vsel %vm1189, %v1174, %v1185
      %v1195 = vsel %vm1189, %v1176, %v1186
      %v1196 = vsel %vm1189, %v1178, %v1187
      %v1197 = vsel %vm1189, %v1180, %v1188
      %1206 = vst.msk [vmem:[%s238 + $0x4] sm:$0xf] %vm866, %v1190
      %1207 = vst.msk [vmem:[%s238 + $0xc] sm:$0xf] %vm866, %v1191
      %1208 = vst.msk [vmem:[%s238 + $0x14] sm:$0xf] %vm866, %v1192
      %1209 = vst.msk [vmem:[%s238 + $0x1c] sm:$0xf] %vm866, %v1193
      %1210 = vst.msk [vmem:[%s238 + $0x24] sm:$0xf] %vm866, %v1194
      %1211 = vst.msk [vmem:[%s238 + $0x2c] sm:$0xf] %vm866, %v1195
      %1212 = vst.msk [vmem:[%s238 + $0x34] sm:$0xf] %vm866, %v1196
      %1213 = vst.msk [vmem:[%s238 + $0x3c] sm:$0xf] %vm866, %v1197
      %v1214 = vpack.c.b16 %v1149, %v1149
      %v1215 = vpack.c.b16 %v1150, %v1150
      %v1216 = vpack.c.b16 %v1151, %v1151
      %v1217 = vpack.c.b16 %v1152, %v1152
      %v1218 = vpack.c.b16 %v1153, %v1153
      %v1219 = vpack.c.b16 %v1154, %v1154
      %v1220 = vpack.c.b16 %v1155, %v1155
      %v1221 = vpack.c.b16 %v1156, %v1156
      %1222 = vrot.lane.b32.xlu0 %v1214, 98
      %v1223 = vpop.permute.xlu0 %1222
      %1224 = vrot.lane.b32.xlu0 %v1215, 98
      %v1225 = vpop.permute.xlu0 %1224
      %1226 = vrot.lane.b32.xlu0 %v1216, 98
      %v1227 = vpop.permute.xlu0 %1226
      %1228 = vrot.lane.b32.xlu0 %v1217, 98
      %v1229 = vpop.permute.xlu0 %1228
      %1230 = vrot.lane.b32.xlu0 %v1218, 98
      %v1231 = vpop.permute.xlu0 %1230
      %1232 = vrot.lane.b32.xlu0 %v1219, 98
      %v1233 = vpop.permute.xlu0 %1232
      %1234 = vrot.lane.b32.xlu0 %v1220, 98
      %v1235 = vpop.permute.xlu0 %1234
      %1236 = vrot.lane.b32.xlu0 %v1221, 98
      %v1237 = vpop.permute.xlu0 %1236
      %1246 = vst.msk [vmem:[%s238 + $0x4] sm:$0xf] %vm936, %v1223
      %1247 = vst.msk [vmem:[%s238 + $0xc] sm:$0xf] %vm936, %v1225
      %1248 = vst.msk [vmem:[%s238 + $0x14] sm:$0xf] %vm936, %v1227
      %1249 = vst.msk [vmem:[%s238 + $0x1c] sm:$0xf] %vm936, %v1229
      %1250 = vst.msk [vmem:[%s238 + $0x24] sm:$0xf] %vm936, %v1231
      %1251 = vst.msk [vmem:[%s238 + $0x2c] sm:$0xf] %vm936, %v1233
      %1252 = vst.msk [vmem:[%s238 + $0x34] sm:$0xf] %vm936, %v1235
      %1253 = vst.msk [vmem:[%s238 + $0x3c] sm:$0xf] %vm936, %v1237
      %s1254 = smul.u32 8, %s18
      %p1255 = scmp.lt.s32.totalorder %s19, 1
      %s1256 = scalar_select %p1255, %s19, 1
      %p1257 = scmp.lt.s32.totalorder %s1254, 7
      %s1258 = scalar_select %p1257, %s1254, 7
      %s1259 = smul.addr %s1258, 2
      %s1260 = smul.addr %s1256, 16
      %s1261 = sadd.s32 %s1259, %s1260
      %s1262 = smul.addr %s1261, 4
      %s1263 = scalar_lea.vmem %s3, %s1262
      // Predicated region
      $region33: #{conv3x3_block_x1_forward.1} parent=31 // pred_check
        %p1264 = pneg %p124
      $region34: #{conv3x3_block_x1_forward.1} parent=31 // pred_check_branch
        %1266 = sbr.rel (%p1264) target = $region36
      $region35: #{conv3x3_block_x1_forward.1} parent=31 // pred_region
        %s1267 = smul.u32 8, %s18
      $region36: #{conv3x3_block_x1_forward.1} parent=31 // pred_fallthru
        _
    $region32: #{conv3x3_block_x1_forward.1} parent=5 // pred_fallthru
      _
    %p1268 = scmp.le.s32.totalorder 2, %s9
    // Predicated region
    $region37: #{conv3x3_block_x1_forward.1} parent=5 // pred_check
      %p1269 = pneg %p1268
    $region38: #{conv3x3_block_x1_forward.1} parent=5 // pred_check_branch
      %1271 = sbr.rel (%p1269) target = $region40
    $region39: #{conv3x3_block_x1_forward.1} parent=5 // pred_region
      %s1272 = ssub.s32 %s9, 2
      // Predicated region
      $region41: #{conv3x3_block_x1_forward.1} parent=39 // pred_check
        %p1273 = pneg %p130
      $region42: #{conv3x3_block_x1_forward.1} parent=39 // pred_check_branch
        %1275 = sbr.rel (%p1273) target = $region44
      $region43: #{conv3x3_block_x1_forward.1} parent=39 // pred_region
        %s1276 = smul.u32 8, %s20
        %p1277 = scmp.lt.s32.totalorder %s21, 1
        %s1278 = scalar_select %p1277, %s21, 1
        %p1279 = scmp.lt.s32.totalorder %s1276, 7
        %s1280 = scalar_select %p1279, %s1276, 7
        %s1281 = smul.addr %s1280, 2
        %s1282 = smul.addr %s1278, 16
        %s1283 = sadd.s32 %s1281, %s1282
        %s1284 = smul.addr %s1283, 4
        %s1285 = scalar_lea.vmem %s3, %s1284
      $region44: #{conv3x3_block_x1_forward.1} parent=39 // pred_fallthru
        _
    $region40: #{conv3x3_block_x1_forward.1} parent=5 // pred_fallthru
      _
  $region6: #{conv3x3_block_x1_forward.1} parent=0 // loop_footer
    %s13 = sadd.s32 1, %s9
  $region7: #{conv3x3_block_x1_forward.1} parent=0 // loop_footer_branch
    %8 = sbr.rel target = $region3
  $region8: #{conv3x3_block_x1_forward.1} parent=0 // loop_exit
    _

</llo_original>
